<compile_context>
chip_gen: v7x
topology: tpu7x:2x2x1
jax: 0.10.0
libtpu: 0.0.40
codegen_flags: <defaults>
</compile_context>

<pallas_src>
import jax
import jax.numpy as jnp
from jax import lax
from jax.experimental import pallas as pl
from jax.experimental.pallas import tpu as pltpu

# ---- model hyperparameters (small, synthetic) --------------------------------
VOCAB = 50
VOCAB_PAD = 64                            # padded contraction dim for the one-hot gather matmul
EMB_DIM = 32
DIM_CHANNEL = 8
KERNEL_WINS = (3, 4, 5)
NUM_CLASS = 4
BATCH = 2
SEQ_LEN = 16

MAX_WIN = max(KERNEL_WINS)
N_GROUPS = len(KERNEL_WINS)
TOTAL_C = N_GROUPS * DIM_CHANNEL          # 24 fused conv output channels
OUT_PAD = 128                             # lane-dense output slab; sliced back to NUM_CLASS
NEG_MASK = -1e30                          # additive mask for invalid sliding-window positions


def textcnn_kernel(tok_ref, emb_tbl_ref, wconv_ref, bconv_ref, mask_ref,
                   wfc_ref, bfc_ref, out_ref):
    """Fused gather + multi-width conv + ReLU + masked global max-pool + FC for one batch tile."""
    n_rows = tok_ref.shape[0]                       # b_tile * seq_len (token rows in this tile)
    vocab_pad, emb_dim = emb_tbl_ref.shape
    seq_len, total_c = mask_ref.shape
    b_tile = n_rows // seq_len

    # ---- embedding gather as an all-bf16 one-hot MXU matmul (f32 accumulate; exact for
    #      in-range ids).  Out-of-range / remainder-tile garbage ids give an all-zero row
    #      instead of an index error (inputs are assumed pre-validated).
    tok = tok_ref[...]                                                   # (n_rows, 1) int32
    vocab_iota = lax.broadcasted_iota(jnp.int32, (n_rows, vocab_pad), 1)
    one_hot = (tok == vocab_iota).astype(jnp.bfloat16)                   # (n_rows, Vpad) bf16
    emb = jnp.dot(one_hot, emb_tbl_ref[...],
                  preferred_element_type=jnp.float32)                    # (n_rows, E) f32
    emb_bf = emb.astype(jnp.bfloat16)

    # ---- fused multi-width conv as MAX_WIN accumulated K=E matmuls (no im2col buffer).
    # Zero-pad MAX_WIN-1 rows so every shifted slice has the same length.  Shift rows j >= w
    # carry zero weights for window w; cross-sequence / padded reads only land on positions
    # that are masked out before the max-pool below.
    pad = jnp.zeros((MAX_WIN - 1, emb_dim), jnp.bfloat16)
    emb_pad = jnp.concatenate([emb_bf, pad], axis=0)                     # (n_rows + 4, E)
    acc = jnp.dot(emb_bf, wconv_ref[0], preferred_element_type=jnp.float32)
    for j in range(1, MAX_WIN):                                          # static unroll
        acc = acc + jnp.dot(emb_pad[j:j + n_rows, :], wconv_ref[j],
                            preferred_element_type=jnp.float32)          # (n_rows, 3*C) f32
    acc = jnp.maximum(acc + bconv_ref[...], 0.0)                         # conv bias + ReLU (VPU)

    # ---- masked global max-pool per sequence (precomputed additive 0 / -1e30 mask).
    acc3 = acc.reshape(b_tile, seq_len, total_c)
    pooled = jnp.max(acc3 + mask_ref[...], axis=1)                       # (b_tile, 3*C)

    # ---- FC (channels already contiguous -> no concat). Dropout = identity at inference.
    # TODO(synk): training-mode nn.Dropout(0.4) not implemented (inference identity).
    logits = jnp.dot(pooled.astype(jnp.bfloat16), wfc_ref[...],
                     preferred_element_type=jnp.float32) + bfc_ref[...]  # (b_tile, OUT_PAD) f32
    out_ref[...] = logits.astype(out_ref.dtype)                          # bf16 lane-dense slab


@jax.jit
def textcnn_forward(token_ids, packed):
    """token_ids: (B, L) int32; packed: kernel-layout params from pack_params()."""
    batch, seq_len = token_ids.shape
    # Batch tiling: whole batch in one tile when small (grid=1); 128-row batch tiles once the
    # batch is large enough to amortize the ~0.35 us/step pipeline overhead (and to give the
    # parallel grid axis >= 2 steps for v7x dual-TC).  Remainder tiles read padded/garbage
    # token rows; those output rows are dropped on writeback -- benign, do not "fix".
    b_tile = batch if batch <= 128 else 128
    grid = (pl.cdiv(batch, b_tile),)
    tok_flat = token_ids.reshape(batch * seq_len, 1).astype(jnp.int32)   # one-time XLA reshape

    out = pl.pallas_call(
        textcnn_kernel,
        out_shape=jax.ShapeDtypeStruct((batch, OUT_PAD), jnp.bfloat16),
        grid_spec=pltpu.PrefetchScalarGridSpec(
            num_scalar_prefetch=0,
            grid=grid,
            in_specs=[
                pl.BlockSpec((b_tile * seq_len, 1), lambda i: (i, 0)),        # tokens: per-tile
                pl.BlockSpec((VOCAB_PAD, EMB_DIM), lambda i: (0, 0)),         # embed tbl (resident)
                pl.BlockSpec((MAX_WIN, EMB_DIM, TOTAL_C), lambda i: (0, 0, 0)),
                pl.BlockSpec((1, TOTAL_C), lambda i: (0, 0)),                 # conv bias
                pl.BlockSpec((seq_len, TOTAL_C), lambda i: (0, 0)),           # pooling mask
                pl.BlockSpec((TOTAL_C, OUT_PAD), lambda i: (0, 0)),           # fc weight
                pl.BlockSpec((1, OUT_PAD), lambda i: (0, 0)),                 # fc bias
            ],
            out_specs=pl.BlockSpec((b_tile, OUT_PAD), lambda i: (i, 0)),
        ),
        compiler_params=pltpu.CompilerParams(
            dimension_semantics=("parallel",),              # megacore / v7x 2-TC when grid >= 2
            vmem_limit_bytes=32 * 1024 * 1024),
    )(tok_flat, packed['embed'], packed['conv_w'], packed['conv_b'],
      packed['pool_mask'], packed['fc_w'], packed['fc_b'])
    return out[:, :NUM_CLASS].astype(jnp.float32)


def init_params(key):
    """Deterministic synthetic parameters matching the PyTorch module's shapes."""
    keys = jax.random.split(key, 3 + 2 * len(KERNEL_WINS))
    params = {}
    # nn.Embedding(len(vocab), emb_dim)
    params['embed'] = jax.random.normal(keys[0], (VOCAB, EMB_DIM), jnp.float32) * 0.1
    # nn.Conv2d(1, C, (w, E)) -> torch weight (C, 1, w, E); stored transposed as (w, E, C).
    conv_w, conv_b = [], []
    for i, w in enumerate(KERNEL_WINS):
        conv_w.append(jax.random.normal(keys[1 + 2 * i], (w, EMB_DIM, DIM_CHANNEL), jnp.float32) * 0.05)
        conv_b.append(jax.random.normal(keys[2 + 2 * i], (1, DIM_CHANNEL), jnp.float32) * 0.05)
    params['conv_w'] = conv_w
    params['conv_b'] = conv_b
    # nn.Linear(len(wins)*C, num_class) -> torch weight (num_class, in); stored transposed.
    params['fc_w'] = jax.random.normal(keys[-2], (TOTAL_C, NUM_CLASS), jnp.float32) * 0.05
    params['fc_b'] = jax.random.normal(keys[-1], (1, NUM_CLASS), jnp.float32) * 0.05
    return params


def pack_params(params):
    """Repack params into the fused kernel layout (done once, outside the hot path)."""
    # Embedding table: bf16, vocab padded 50 -> 64 rows (zero rows are never selected).
    embed = jnp.zeros((VOCAB_PAD, EMB_DIM), jnp.bfloat16).at[:VOCAB, :].set(
        params['embed'].astype(jnp.bfloat16))
    # Fused conv weight: (MAX_WIN, E, 3*C) with zero padding on the shift axis for smaller windows.
    wconv = jnp.zeros((MAX_WIN, EMB_DIM, TOTAL_C), jnp.float32)
    bconv = jnp.zeros((1, TOTAL_C), jnp.float32)
    for g, w in enumerate(KERNEL_WINS):
        wconv = wconv.at[:w, :, g * DIM_CHANNEL:(g + 1) * DIM_CHANNEL].set(params['conv_w'][g])
        bconv = bconv.at[:, g * DIM_CHANNEL:(g + 1) * DIM_CHANNEL].set(params['conv_b'][g])
    wconv = wconv.astype(jnp.bfloat16)
    # Additive pooling mask: 0 at valid sliding-window positions, -1e30 at invalid ones
    # (smaller windows have more valid positions than larger ones).
    pool_mask = jnp.zeros((SEQ_LEN, TOTAL_C), jnp.float32)
    for g, w in enumerate(KERNEL_WINS):
        limit = SEQ_LEN - w + 1
        pool_mask = pool_mask.at[limit:, g * DIM_CHANNEL:(g + 1) * DIM_CHANNEL].set(NEG_MASK)
    # FC weight/bias padded to a lane-dense 128-wide output slab.
    wfc = jnp.zeros((TOTAL_C, OUT_PAD), jnp.bfloat16).at[:, :NUM_CLASS].set(
        params['fc_w'].astype(jnp.bfloat16))
    bfc = jnp.zeros((1, OUT_PAD), jnp.float32).at[:, :NUM_CLASS].set(params['fc_b'])
    return {'embed': embed, 'conv_w': wconv, 'conv_b': bconv,
            'pool_mask': pool_mask, 'fc_w': wfc, 'fc_b': bfc}


def textcnn_reference(token_ids, params):
    """Pure-JAX f32 reference of the PyTorch forward (for a loose numerical check)."""
    emb = params['embed'][token_ids]                                        # (B, L, E)
    L = token_ids.shape[1]
    pooled = []
    for g, w in enumerate(KERNEL_WINS):
        W, b = params['conv_w'][g], params['conv_b'][g]
        l_out = L - w + 1
        conv = sum(jnp.einsum('ble,ec->blc', emb[:, j:j + l_out, :], W[j]) for j in range(w))
        conv = jnp.maximum(conv + b[None, :, :], 0.0)
        pooled.append(conv.max(axis=1))
    fc_in = jnp.concatenate(pooled, axis=-1)
    return fc_in @ params['fc_w'] + params['fc_b']


if __name__ == "__main__":
    key = jax.random.PRNGKey(0)
    k_tok, k_par = jax.random.split(key)
    token_ids = jax.random.randint(k_tok, (BATCH, SEQ_LEN), 0, VOCAB, dtype=jnp.int32)
    params = init_params(k_par)
    packed = pack_params(params)

    logits = textcnn_forward(token_ids, packed)
    jax.block_until_ready(logits)
    assert logits.shape == (BATCH, NUM_CLASS)
    assert bool(jnp.all(jnp.isfinite(logits)))

    # bf16 embedding table / activations / output slab -> ~1e-2-level deviation vs f32 reference.
    ref = textcnn_reference(token_ids, params)
    assert bool(jnp.allclose(logits, ref, atol=2e-2, rtol=1e-1)), "mismatch vs reference"

    print("KERNEL_OK")
</pallas_src>

<mosaic_0001>
module attributes {stable_mosaic.version = 11 : i64} {
  func.func @textcnn_kernel(%arg0: i32, %arg1: memref<32x1xi32, #tpu.memory_space<vmem>>, %arg2: memref<64x32xbf16, #tpu.memory_space<vmem>>, %arg3: memref<5x32x24xbf16, #tpu.memory_space<vmem>>, %arg4: memref<1x24xf32, #tpu.memory_space<vmem>>, %arg5: memref<16x24xf32, #tpu.memory_space<vmem>>, %arg6: memref<24x128xbf16, #tpu.memory_space<vmem>>, %arg7: memref<1x128xf32, #tpu.memory_space<vmem>>, %arg8: memref<2x128xbf16, #tpu.memory_space<vmem>>) attributes {dimension_semantics = [#tpu.dimension_semantics<parallel>], iteration_bounds = array<i64: 1>, scalar_prefetch = 0 : i64, scratch_operands = 0 : i64, tpu.core_type = #tpu.core_type<tc>, window_params = [{transform_indices = @transform_0, window_bounds = array<i64: 32, 1>}, {pipeline_mode = #tpu.pipeline_mode<synchronous>, transform_indices = @transform_1, window_bounds = array<i64: 64, 32>}, {pipeline_mode = #tpu.pipeline_mode<synchronous>, transform_indices = @transform_2, window_bounds = array<i64: 5, 32, 24>}, {pipeline_mode = #tpu.pipeline_mode<synchronous>, transform_indices = @transform_3, window_bounds = array<i64: 1, 24>}, {pipeline_mode = #tpu.pipeline_mode<synchronous>, transform_indices = @transform_4, window_bounds = array<i64: 16, 24>}, {pipeline_mode = #tpu.pipeline_mode<synchronous>, transform_indices = @transform_5, window_bounds = array<i64: 24, 128>}, {pipeline_mode = #tpu.pipeline_mode<synchronous>, transform_indices = @transform_6, window_bounds = array<i64: 1, 128>}, {transform_indices = @transform_7, window_bounds = array<i64: 2, 128>}]} {
    %c0 = arith.constant 0 : index
    %c0_0 = arith.constant 0 : index
    %0 = vector.load %arg1[%c0, %c0_0] : memref<32x1xi32, #tpu.memory_space<vmem>>, vector<32x1xi32>
    %1 = tpu.iota {dimensions = array<i32: 1>} : vector<32x64xi32>
    %2 = vector.broadcast %0 : vector<32x1xi32> to vector<32x64xi32>
    %3 = arith.cmpi eq, %2, %1 : vector<32x64xi32>
    %4 = arith.extui %3 : vector<32x64xi1> to vector<32x64xi32>
    %5 = arith.sitofp %4 : vector<32x64xi32> to vector<32x64xf32>
    %6 = arith.truncf %5 : vector<32x64xf32> to vector<32x64xbf16>
    %c0_1 = arith.constant 0 : index
    %c0_2 = arith.constant 0 : index
    %7 = vector.load %arg2[%c0_1, %c0_2] : memref<64x32xbf16, #tpu.memory_space<vmem>>, vector<64x32xbf16>
    %cst = arith.constant dense<0.000000e+00> : vector<32x32xf32>
    %8 = tpu.matmul %6, %7, %cst {dimension_numbers = #tpu.dot_dimension_numbers<[1], [0], [0], [1], [0, 0, 1, 1], [], []>} : vector<32x64xbf16>, vector<64x32xbf16>, vector<32x32xf32> -> vector<32x32xf32>
    %9 = arith.truncf %8 : vector<32x32xf32> to vector<32x32xbf16>
    %cst_3 = arith.constant 0.000000e+00 : bf16
    %10 = vector.broadcast %cst_3 : bf16 to vector<4x32xbf16>
    %11 = tpu.concatenate %9, %10 in 0 : vector<32x32xbf16>, vector<4x32xbf16> -> vector<36x32xbf16>
    %c0_4 = arith.constant 0 : index
    %c0_5 = arith.constant 0 : index
    %c0_6 = arith.constant 0 : index
    %12 = vector.load %arg3[%c0_4, %c0_5, %c0_6] : memref<5x32x24xbf16, #tpu.memory_space<vmem>>, vector<1x32x24xbf16>
    %13 = vector.shape_cast %12 : vector<1x32x24xbf16> to vector<32x24xbf16>
    %cst_7 = arith.constant dense<0.000000e+00> : vector<32x24xf32>
    %14 = tpu.matmul %9, %13, %cst_7 {dimension_numbers = #tpu.dot_dimension_numbers<[1], [0], [0], [1], [0, 0, 1, 1], [], []>} : vector<32x32xbf16>, vector<32x24xbf16>, vector<32x24xf32> -> vector<32x24xf32>
    %15 = vector.extract_strided_slice %11 {offsets = [1, 0], sizes = [32, 32], strides = [1, 1]} : vector<36x32xbf16> to vector<32x32xbf16>
    %c1 = arith.constant 1 : index
    %c0_8 = arith.constant 0 : index
    %c0_9 = arith.constant 0 : index
    %16 = vector.load %arg3[%c1, %c0_8, %c0_9] : memref<5x32x24xbf16, #tpu.memory_space<vmem>>, vector<1x32x24xbf16>
    %17 = vector.shape_cast %16 : vector<1x32x24xbf16> to vector<32x24xbf16>
    %cst_10 = arith.constant dense<0.000000e+00> : vector<32x24xf32>
    %18 = tpu.matmul %15, %17, %cst_10 {dimension_numbers = #tpu.dot_dimension_numbers<[1], [0], [0], [1], [0, 0, 1, 1], [], []>} : vector<32x32xbf16>, vector<32x24xbf16>, vector<32x24xf32> -> vector<32x24xf32>
    %19 = arith.addf %14, %18 : vector<32x24xf32>
    %20 = vector.extract_strided_slice %11 {offsets = [2, 0], sizes = [32, 32], strides = [1, 1]} : vector<36x32xbf16> to vector<32x32xbf16>
    %c2 = arith.constant 2 : index
    %c0_11 = arith.constant 0 : index
    %c0_12 = arith.constant 0 : index
    %21 = vector.load %arg3[%c2, %c0_11, %c0_12] : memref<5x32x24xbf16, #tpu.memory_space<vmem>>, vector<1x32x24xbf16>
    %22 = vector.shape_cast %21 : vector<1x32x24xbf16> to vector<32x24xbf16>
    %cst_13 = arith.constant dense<0.000000e+00> : vector<32x24xf32>
    %23 = tpu.matmul %20, %22, %cst_13 {dimension_numbers = #tpu.dot_dimension_numbers<[1], [0], [0], [1], [0, 0, 1, 1], [], []>} : vector<32x32xbf16>, vector<32x24xbf16>, vector<32x24xf32> -> vector<32x24xf32>
    %24 = arith.addf %19, %23 : vector<32x24xf32>
    %25 = vector.extract_strided_slice %11 {offsets = [3, 0], sizes = [32, 32], strides = [1, 1]} : vector<36x32xbf16> to vector<32x32xbf16>
    %c3 = arith.constant 3 : index
    %c0_14 = arith.constant 0 : index
    %c0_15 = arith.constant 0 : index
    %26 = vector.load %arg3[%c3, %c0_14, %c0_15] : memref<5x32x24xbf16, #tpu.memory_space<vmem>>, vector<1x32x24xbf16>
    %27 = vector.shape_cast %26 : vector<1x32x24xbf16> to vector<32x24xbf16>
    %cst_16 = arith.constant dense<0.000000e+00> : vector<32x24xf32>
    %28 = tpu.matmul %25, %27, %cst_16 {dimension_numbers = #tpu.dot_dimension_numbers<[1], [0], [0], [1], [0, 0, 1, 1], [], []>} : vector<32x32xbf16>, vector<32x24xbf16>, vector<32x24xf32> -> vector<32x24xf32>
    %29 = arith.addf %24, %28 : vector<32x24xf32>
    %30 = vector.extract_strided_slice %11 {offsets = [4, 0], sizes = [32, 32], strides = [1, 1]} : vector<36x32xbf16> to vector<32x32xbf16>
    %c4 = arith.constant 4 : index
    %c0_17 = arith.constant 0 : index
    %c0_18 = arith.constant 0 : index
    %31 = vector.load %arg3[%c4, %c0_17, %c0_18] : memref<5x32x24xbf16, #tpu.memory_space<vmem>>, vector<1x32x24xbf16>
    %32 = vector.shape_cast %31 : vector<1x32x24xbf16> to vector<32x24xbf16>
    %cst_19 = arith.constant dense<0.000000e+00> : vector<32x24xf32>
    %33 = tpu.matmul %30, %32, %cst_19 {dimension_numbers = #tpu.dot_dimension_numbers<[1], [0], [0], [1], [0, 0, 1, 1], [], []>} : vector<32x32xbf16>, vector<32x24xbf16>, vector<32x24xf32> -> vector<32x24xf32>
    %34 = arith.addf %29, %33 : vector<32x24xf32>
    %c0_20 = arith.constant 0 : index
    %c0_21 = arith.constant 0 : index
    %35 = vector.load %arg4[%c0_20, %c0_21] : memref<1x24xf32, #tpu.memory_space<vmem>>, vector<1x24xf32>
    %36 = vector.broadcast %35 : vector<1x24xf32> to vector<32x24xf32>
    %37 = arith.addf %34, %36 : vector<32x24xf32>
    %cst_22 = arith.constant 0.000000e+00 : f32
    %38 = vector.broadcast %cst_22 : f32 to vector<32x24xf32>
    %39 = arith.maximumf %37, %38 : vector<32x24xf32>
    %40 = vector.shape_cast %39 : vector<32x24xf32> to vector<2x16x24xf32>
    %c0_23 = arith.constant 0 : index
    %c0_24 = arith.constant 0 : index
    %41 = vector.load %arg5[%c0_23, %c0_24] : memref<16x24xf32, #tpu.memory_space<vmem>>, vector<16x24xf32>
    %42 = vector.shape_cast %41 : vector<16x24xf32> to vector<1x16x24xf32>
    %43 = vector.broadcast %42 : vector<1x16x24xf32> to vector<2x16x24xf32>
    %44 = arith.addf %40, %43 : vector<2x16x24xf32>
    %cst_25 = arith.constant dense<0xFF800000> : vector<2x24xf32>
    %45 = vector.multi_reduction <maximumf>, %44, %cst_25 [1] : vector<2x16x24xf32> to vector<2x24xf32>
    %46 = arith.truncf %45 : vector<2x24xf32> to vector<2x24xbf16>
    %c0_26 = arith.constant 0 : index
    %c0_27 = arith.constant 0 : index
    %47 = vector.load %arg6[%c0_26, %c0_27] : memref<24x128xbf16, #tpu.memory_space<vmem>>, vector<24x128xbf16>
    %cst_28 = arith.constant dense<0.000000e+00> : vector<2x128xf32>
    %48 = tpu.matmul %46, %47, %cst_28 {dimension_numbers = #tpu.dot_dimension_numbers<[1], [0], [0], [1], [0, 0, 1, 1], [], []>} : vector<2x24xbf16>, vector<24x128xbf16>, vector<2x128xf32> -> vector<2x128xf32>
    %c0_29 = arith.constant 0 : index
    %c0_30 = arith.constant 0 : index
    %49 = vector.load %arg7[%c0_29, %c0_30] : memref<1x128xf32, #tpu.memory_space<vmem>>, vector<1x128xf32>
    %50 = vector.broadcast %49 : vector<1x128xf32> to vector<2x128xf32>
    %51 = arith.addf %48, %50 : vector<2x128xf32>
    %52 = arith.truncf %51 : vector<2x128xf32> to vector<2x128xbf16>
    %c0_31 = arith.constant 0 : index
    %c0_32 = arith.constant 0 : index
    %53 = vector.load %arg8[%c0_31, %c0_32] : memref<2x128xbf16, #tpu.memory_space<vmem>>, vector<2x128xbf16>
    tpu.vector_store %arg8[%c0_31, %c0_32], %52 {strides = array<i32>} : memref<2x128xbf16, #tpu.memory_space<vmem>>, vector<2x128xbf16>,
    return
  }
  func.func @transform_0(%arg0: i32) -> (i32, i32) {
    %c0_i32 = arith.constant 0 : i32
    %c0_i32_0 = arith.constant 0 : i32
    return %arg0, %c0_i32 : i32, i32
  }
  func.func @transform_1(%arg0: i32) -> (i32, i32) {
    %c0_i32 = arith.constant 0 : i32
    %c0_i32_0 = arith.constant 0 : i32
    %c0_i32_1 = arith.constant 0 : i32
    return %c0_i32, %c0_i32_0 : i32, i32
  }
  func.func @transform_2(%arg0: i32) -> (i32, i32, i32) {
    %c0_i32 = arith.constant 0 : i32
    %c0_i32_0 = arith.constant 0 : i32
    %c0_i32_1 = arith.constant 0 : i32
    %c0_i32_2 = arith.constant 0 : i32
    return %c0_i32, %c0_i32_0, %c0_i32_1 : i32, i32, i32
  }
  func.func @transform_3(%arg0: i32) -> (i32, i32) {
    %c0_i32 = arith.constant 0 : i32
    %c0_i32_0 = arith.constant 0 : i32
    %c0_i32_1 = arith.constant 0 : i32
    return %c0_i32, %c0_i32_0 : i32, i32
  }
  func.func @transform_4(%arg0: i32) -> (i32, i32) {
    %c0_i32 = arith.constant 0 : i32
    %c0_i32_0 = arith.constant 0 : i32
    %c0_i32_1 = arith.constant 0 : i32
    return %c0_i32, %c0_i32_0 : i32, i32
  }
  func.func @transform_5(%arg0: i32) -> (i32, i32) {
    %c0_i32 = arith.constant 0 : i32
    %c0_i32_0 = arith.constant 0 : i32
    %c0_i32_1 = arith.constant 0 : i32
    return %c0_i32, %c0_i32_0 : i32, i32
  }
  func.func @transform_6(%arg0: i32) -> (i32, i32) {
    %c0_i32 = arith.constant 0 : i32
    %c0_i32_0 = arith.constant 0 : i32
    %c0_i32_1 = arith.constant 0 : i32
    return %c0_i32, %c0_i32_0 : i32, i32
  }
  func.func @transform_7(%arg0: i32) -> (i32, i32) {
    %c0_i32 = arith.constant 0 : i32
    %c0_i32_0 = arith.constant 0 : i32
    return %arg0, %c0_i32 : i32, i32
  }
}

</mosaic_0001>

<llo_original>
// kernel: textcnn_forward.1
$region0: #{textcnn_forward.1}
  #allocation0 [shape = 'u32[]', space=smem, size = 0x4, offset = 0x4, fixed_abs, tag = 'smem constant byte address 0x4 - core index']
  #allocation1 [shape = 'u32[144,128]{1,0:T(1,128)}', space=vmem, size = 0x12000, scoped, tag = 'internal scratch']
  %s0 = inlined_call_operand.vmem [shape: s32[32,1], index: 0, kind: input, shape index: {}]
  %s1 = inlined_call_operand.vmem [shape: bf16[64,32], index: 1, kind: input, shape index: {}]
  %s2 = inlined_call_operand.vmem [shape: bf16[5,32,24], index: 2, kind: input, shape index: {}]
  %s3 = inlined_call_operand.vmem [shape: f32[1,24], index: 3, kind: input, shape index: {}]
  %s4 = inlined_call_operand.vmem [shape: f32[16,24], index: 4, kind: input, shape index: {}]
  %s5 = inlined_call_operand.vmem [shape: bf16[24,128], index: 5, kind: input, shape index: {}]
  %s6 = inlined_call_operand.vmem [shape: f32[1,128], index: 6, kind: input, shape index: {}]
  %s7 = inlined_call_operand.vmem [shape: bf16[2,128], index: 7, kind: output, shape index: {}]
  %s8 = sld [smem:[#allocation0]]
  $region38: #{textcnn_forward.1} parent=0
    _
  %s10 = ssub.s32 1, %s8
  %s11 = scalar_select 0, %s10, %s8
  // Predicated region
  $region2: #{textcnn_forward.1} parent=0 // pred_check
    _
  $region3: #{textcnn_forward.1} parent=0 // pred_check_branch
    %13 = sbr.rel (0) target = $region5
  $region4: #{textcnn_forward.1} parent=0 // pred_region
    _
  $region5: #{textcnn_forward.1} parent=0 // pred_fallthru
    _
  // Predicated region
  $region6: #{textcnn_forward.1} parent=0 // pred_check
    _
  $region7: #{textcnn_forward.1} parent=0 // pred_check_branch
    %15 = sbr.rel (0) target = $region9
  $region8: #{textcnn_forward.1} parent=0 // pred_region
    _
  $region9: #{textcnn_forward.1} parent=0 // pred_fallthru
    _
  // Predicated region
  $region10: #{textcnn_forward.1} parent=0 // pred_check
    _
  $region11: #{textcnn_forward.1} parent=0 // pred_check_branch
    %17 = sbr.rel (0) target = $region13
  $region12: #{textcnn_forward.1} parent=0 // pred_region
    _
  $region13: #{textcnn_forward.1} parent=0 // pred_fallthru
    _
  // Predicated region
  $region14: #{textcnn_forward.1} parent=0 // pred_check
    _
  $region15: #{textcnn_forward.1} parent=0 // pred_check_branch
    %19 = sbr.rel (0) target = $region17
  $region16: #{textcnn_forward.1} parent=0 // pred_region
    _
  $region17: #{textcnn_forward.1} parent=0 // pred_fallthru
    _
  // Predicated region
  $region18: #{textcnn_forward.1} parent=0 // pred_check
    _
  $region19: #{textcnn_forward.1} parent=0 // pred_check_branch
    %21 = sbr.rel (0) target = $region21
  $region20: #{textcnn_forward.1} parent=0 // pred_region
    _
  $region21: #{textcnn_forward.1} parent=0 // pred_fallthru
    _
  // Predicated region
  $region22: #{textcnn_forward.1} parent=0 // pred_check
    _
  $region23: #{textcnn_forward.1} parent=0 // pred_check_branch
    %23 = sbr.rel (0) target = $region25
  $region24: #{textcnn_forward.1} parent=0 // pred_region
    _
  $region25: #{textcnn_forward.1} parent=0 // pred_fallthru
    _
  // Predicated region
  $region26: #{textcnn_forward.1} parent=0 // pred_check
    _
  $region27: #{textcnn_forward.1} parent=0 // pred_check_branch
    %25 = sbr.rel (0) target = $region29
  $region28: #{textcnn_forward.1} parent=0 // pred_region
    _
  $region29: #{textcnn_forward.1} parent=0 // pred_fallthru
    _
  %v27 = vld [vmem:[%s0] sm:$0xff]
  %v28 = vld [vmem:[%s0 + $0x8] sm:$0xff]
  %v29 = vld [vmem:[%s0 + $0x10] sm:$0xff]
  %v30 = vld [vmem:[%s0 + $0x18] sm:$0xff]
  %v31 = vlaneseq
  %v32 = vand.u32 %v31, 127
  %33 = vset.pattern.permute.xlu0 0
  %34 = vperm.xlu0 %33, %v27
  %v35 = vpop.permute.xlu0 %34
  %36 = vset.pattern.permute.xlu0 0
  %37 = vperm.xlu0 %36, %v28
  %v38 = vpop.permute.xlu0 %37
  %39 = vset.pattern.permute.xlu0 0
  %40 = vperm.xlu0 %39, %v29
  %v41 = vpop.permute.xlu0 %40
  %42 = vset.pattern.permute.xlu0 0
  %43 = vperm.xlu0 %42, %v30
  %v44 = vpop.permute.xlu0 %43
  %vm45 = vcmp.eq.s32.totalorder %v35, %v32
  %vm46 = vcmp.eq.s32.totalorder %v38, %v32
  %vm47 = vcmp.eq.s32.totalorder %v41, %v32
  %vm48 = vcmp.eq.s32.totalorder %v44, %v32
  %v49 = vsel %vm45, 1, 0
  %v50 = vsel %vm46, 1, 0
  %v51 = vsel %vm47, 1, 0
  %v52 = vsel %vm48, 1, 0
  %v53 = vcvt.s32.f32 %v49
  %v54 = vcvt.s32.f32 %v50
  %v55 = vcvt.s32.f32 %v51
  %v56 = vcvt.s32.f32 %v52
  %v57 = vpack.c.bf16 %v54, %v53
  %v58 = vpack.c.bf16 %v56, %v55
  %v59 = vld [vmem:[%s1] sm:$0xf]
  %v60 = vld [vmem:[%s1 + $0x4] sm:$0xf]
  %v61 = vld [vmem:[%s1 + $0x8] sm:$0xf]
  %v62 = vld [vmem:[%s1 + $0xc] sm:$0xf]
  %v63 = vld [vmem:[%s1 + $0x10] sm:$0xf]
  %v64 = vld [vmem:[%s1 + $0x14] sm:$0xf]
  %v65 = vld [vmem:[%s1 + $0x18] sm:$0xf]
  %v66 = vld [vmem:[%s1 + $0x1c] sm:$0xf]
  %v75 = vunpack.c.l.b16 %v59
  %v76 = vunpack.c.l.b16 %v60
  %v77 = vunpack.c.l.b16 %v61
  %v78 = vunpack.c.l.b16 %v62
  %v79 = vunpack.c.l.b16 %v63
  %v80 = vunpack.c.l.b16 %v64
  %v81 = vunpack.c.l.b16 %v65
  %v82 = vunpack.c.l.b16 %v66
  %v83 = vpack.c.b16 %v76, %v75
  %v84 = vpack.c.b16 %v78, %v77
  %v85 = vpack.c.b16 %v80, %v79
  %v86 = vpack.c.b16 %v82, %v81
  %vm91 = vcmask 523264
  %v93 = vsel %vm91, %v57, 0
  %v96 = vsel %vm91, %v58, 0
  %98 = vmatprep.subr.bf16.mxu0 0
  %99 = vmatpush1.bf16.msra.mxu0 %v83
  %100 = vmatprep.subr.bf16.mxu0 0
  %101 = vmatpush1.bf16.msra.mxu0 %v84
  %102 = vmatprep.subr.bf16.mxu0 0
  %103 = vmatpush1.bf16.msra.mxu0 %v85
  %104 = vmatprep.subr.bf16.mxu0 0
  %105 = vmatpush1.bf16.msra.mxu0 %v86
  %106 = vmatprep.subr.bf16.mxu0 0
  %107 = vmatpush1.bf16.msra.mxu0 0
  %108 = vmatprep.subr.bf16.mxu0 0
  %109 = vmatpush1.bf16.msra.mxu0 0
  %110 = vmatprep.subr.bf16.mxu0 0
  %111 = vmatpush1.bf16.msra.mxu0 0
  %112 = vmatprep.subr.bf16.mxu0 0
  %113 = vmatpush1.bf16.msra.mxu0 0
  %114 = vmatprep.subr.bf16.mxu0 0
  %115 = vmatpush1.bf16.msra.mxu0 0
  %116 = vmatprep.subr.bf16.mxu0 0
  %117 = vmatpush1.bf16.msra.mxu0 0
  %118 = vmatprep.subr.bf16.mxu0 0
  %119 = vmatpush1.bf16.msra.mxu0 0
  %120 = vmatprep.subr.bf16.mxu0 0
  %121 = vmatpush1.bf16.msra.mxu0 0
  %122 = vmatprep.subr.bf16.mxu0 0
  %123 = vmatpush1.bf16.msra.mxu0 0
  %124 = vmatprep.subr.bf16.mxu0 0
  %125 = vmatpush1.bf16.msra.mxu0 0
  %126 = vmatprep.subr.bf16.mxu0 0
  %127 = vmatpush1.bf16.msra.mxu0 0
  %128 = vmatprep.subr.bf16.mxu0 0
  %129 = vmatpush1.bf16.msra.mxu0 0
  %130 = vmatprep.mubr.bf16.mxu0 0
  %131 = vmatmul.mubr.bf16.gmra.mrb[0].mxu0 %v93
  %v132 = vpop.f32.mrb[0].mxu0
  %v133 = vadd.f32 0.0, %v132
  %v134 = vpop.f32.mrb[0].mxu0
  %v135 = vpop.f32.mrb[0].mxu0
  %v136 = vadd.f32 0.0, %v135
  %v137 = vpop.f32.mrb[0].mxu0
  %138 = vmatprep.mubr.bf16.mxu0 0
  %139 = vmatmul.mubr.bf16.gmra.mrb[0].mxu0 %v96
  %v140 = vpop.f32.mrb[0].mxu0
  %v141 = vadd.f32 0.0, %v140
  %v142 = vpop.f32.mrb[0].mxu0
  %v143 = vpop.f32.mrb[0].mxu0
  %v144 = vadd.f32 0.0, %v143
  %v145 = vpop.f32.mrb[0].mxu0
  %146 = vdwg.mxu0
  %v147 = vpack.c.bf16 %v136, %v133
  %v148 = vpack.c.bf16 %v144, %v141
  %v149 = vld [vmem:[%s2] sm:$0xf]
  %v150 = vld [vmem:[%s2 + $0x4] sm:$0xf]
  %v151 = vld [vmem:[%s2 + $0x8] sm:$0xf]
  %v152 = vld [vmem:[%s2 + $0xc] sm:$0xf]
  %s153 = scalar_lea.vmem %s2, 16
  %v154 = vld [vmem:[%s153] sm:$0xf]
  %v155 = vld [vmem:[%s153 + $0x4] sm:$0xf]
  %v156 = vld [vmem:[%s153 + $0x8] sm:$0xf]
  %v157 = vld [vmem:[%s153 + $0xc] sm:$0xf]
  %vm158 = vsmask.f32 7424
  %v160 = vshrl.u32 %v147, 16
  %v162 = vshll.u32 %v147, 16
  %v164 = vrot.slane %v162, 1
  %v165 = vor.u32 %v160, %v164
  %v167 = vshll.u32 %v148, 16
  %v169 = vrot.slane %v167, 1
  %v170 = vsel %vm158, %v165, %v169
  %v171 = vshrl.u32 %v148, 16
  %v173 = vor.u32 %v171, %v169
  %v175 = vshll.u32 0, 16
  %v177 = vrot.slane %v175, 1
  %v178 = vsel %vm158, %v173, %v177
  %v183 = vunpack.c.l.b16 %v154
  %v184 = vunpack.c.l.b16 %v155
  %v185 = vunpack.c.l.b16 %v156
  %v186 = vunpack.c.l.b16 %v157
  %v187 = vpack.c.b16 %v184, %v183
  %v188 = vpack.c.b16 %v186, %v185
  %vm191 = vcmask 261120
  %v193 = vsel %vm191, %v170, 0
  %v196 = vsel %vm191, %v178, 0
  %198 = vmatprep.subr.bf16.mxu0 0
  %199 = vmatpush1.bf16.msra.mxu0 %v187
  %200 = vmatprep.subr.bf16.mxu0 0
  %201 = vmatpush1.bf16.msra.mxu0 %v188
  %202 = vmatprep.subr.bf16.mxu0 0
  %203 = vmatpush1.bf16.msra.mxu0 0
  %204 = vmatprep.subr.bf16.mxu0 0
  %205 = vmatpush1.bf16.msra.mxu0 0
  %206 = vmatprep.subr.bf16.mxu0 0
  %207 = vmatpush1.bf16.msra.mxu0 0
  %208 = vmatprep.subr.bf16.mxu0 0
  %209 = vmatpush1.bf16.msra.mxu0 0
  %210 = vmatprep.subr.bf16.mxu0 0
  %211 = vmatpush1.bf16.msra.mxu0 0
  %212 = vmatprep.subr.bf16.mxu0 0
  %213 = vmatpush1.bf16.msra.mxu0 0
  %214 = vmatprep.subr.bf16.mxu0 0
  %215 = vmatpush1.bf16.msra.mxu0 0
  %216 = vmatprep.subr.bf16.mxu0 0
  %217 = vmatpush1.bf16.msra.mxu0 0
  %218 = vmatprep.subr.bf16.mxu0 0
  %219 = vmatpush1.bf16.msra.mxu0 0
  %220 = vmatprep.subr.bf16.mxu0 0
  %221 = vmatpush1.bf16.msra.mxu0 0
  %222 = vmatprep.subr.bf16.mxu0 0
  %223 = vmatpush1.bf16.msra.mxu0 0
  %224 = vmatprep.subr.bf16.mxu0 0
  %225 = vmatpush1.bf16.msra.mxu0 0
  %226 = vmatprep.subr.bf16.mxu0 0
  %227 = vmatpush1.bf16.msra.mxu0 0
  %228 = vmatprep.subr.bf16.mxu0 0
  %229 = vmatpush1.bf16.msra.mxu0 0
  %230 = vmatprep.mubr.bf16.mxu0 0
  %231 = vmatmul.mubr.bf16.gmra.mrb[0].mxu0 %v193
  %v232 = vpop.f32.mrb[0].mxu0
  %v233 = vadd.f32 0.0, %v232
  %v234 = vpop.f32.mrb[0].mxu0
  %v235 = vpop.f32.mrb[0].mxu0
  %v236 = vadd.f32 0.0, %v235
  %v237 = vpop.f32.mrb[0].mxu0
  %238 = vmatprep.mubr.bf16.mxu0 0
  %239 = vmatmul.mubr.bf16.gmra.mrb[0].mxu0 %v196
  %v240 = vpop.f32.mrb[0].mxu0
  %v241 = vadd.f32 0.0, %v240
  %v242 = vpop.f32.mrb[0].mxu0
  %v243 = vpop.f32.mrb[0].mxu0
  %v244 = vadd.f32 0.0, %v243
  %v245 = vpop.f32.mrb[0].mxu0
  %246 = vdwg.mxu0
  %v251 = vunpack.c.l.b16 %v149
  %v252 = vunpack.c.l.b16 %v150
  %v253 = vunpack.c.l.b16 %v151
  %v254 = vunpack.c.l.b16 %v152
  %v255 = vpack.c.b16 %v252, %v251
  %v256 = vpack.c.b16 %v254, %v253
  %v259 = vsel %vm191, %v147, 0
  %v261 = vsel %vm191, %v148, 0
  %263 = vmatprep.subr.bf16.mxu0 0
  %264 = vmatpush1.bf16.msra.mxu0 %v255
  %265 = vmatprep.subr.bf16.mxu0 0
  %266 = vmatpush1.bf16.msra.mxu0 %v256
  %267 = vmatprep.subr.bf16.mxu0 0
  %268 = vmatpush1.bf16.msra.mxu0 0
  %269 = vmatprep.subr.bf16.mxu0 0
  %270 = vmatpush1.bf16.msra.mxu0 0
  %271 = vmatprep.subr.bf16.mxu0 0
  %272 = vmatpush1.bf16.msra.mxu0 0
  %273 = vmatprep.subr.bf16.mxu0 0
  %274 = vmatpush1.bf16.msra.mxu0 0
  %275 = vmatprep.subr.bf16.mxu0 0
  %276 = vmatpush1.bf16.msra.mxu0 0
  %277 = vmatprep.subr.bf16.mxu0 0
  %278 = vmatpush1.bf16.msra.mxu0 0
  %279 = vmatprep.subr.bf16.mxu0 0
  %280 = vmatpush1.bf16.msra.mxu0 0
  %281 = vmatprep.subr.bf16.mxu0 0
  %282 = vmatpush1.bf16.msra.mxu0 0
  %283 = vmatprep.subr.bf16.mxu0 0
  %284 = vmatpush1.bf16.msra.mxu0 0
  %285 = vmatprep.subr.bf16.mxu0 0
  %286 = vmatpush1.bf16.msra.mxu0 0
  %287 = vmatprep.subr.bf16.mxu0 0
  %288 = vmatpush1.bf16.msra.mxu0 0
  %289 = vmatprep.subr.bf16.mxu0 0
  %290 = vmatpush1.bf16.msra.mxu0 0
  %291 = vmatprep.subr.bf16.mxu0 0
  %292 = vmatpush1.bf16.msra.mxu0 0
  %293 = vmatprep.subr.bf16.mxu0 0
  %294 = vmatpush1.bf16.msra.mxu0 0
  %295 = vmatprep.mubr.bf16.mxu0 0
  %296 = vmatmul.mubr.bf16.gmra.mrb[0].mxu0 %v259
  %v297 = vpop.f32.mrb[0].mxu0
  %v298 = vadd.f32 %v233, %v297
  %v299 = vpop.f32.mrb[0].mxu0
  %v300 = vpop.f32.mrb[0].mxu0
  %v301 = vadd.f32 %v236, %v300
  %v302 = vpop.f32.mrb[0].mxu0
  %303 = vmatprep.mubr.bf16.mxu0 0
  %304 = vmatmul.mubr.bf16.gmra.mrb[0].mxu0 %v261
  %v305 = vpop.f32.mrb[0].mxu0
  %v306 = vadd.f32 %v241, %v305
  %v307 = vpop.f32.mrb[0].mxu0
  %v308 = vpop.f32.mrb[0].mxu0
  %v309 = vadd.f32 %v244, %v308
  %v310 = vpop.f32.mrb[0].mxu0
  %311 = vdwg.mxu0
  %s312 = scalar_lea.vmem %s2, 32
  %v313 = vld [vmem:[%s312] sm:$0xf]
  %v314 = vld [vmem:[%s312 + $0x4] sm:$0xf]
  %v315 = vld [vmem:[%s312 + $0x8] sm:$0xf]
  %v316 = vld [vmem:[%s312 + $0xc] sm:$0xf]
  %vm320 = vcmask 1046528
  %v321 = vrot.slane %v147, 1
  %v322 = vrot.slane %v148, 1
  %v323 = vsel %vm320, %v321, %v322
  %v324 = vrot.slane 0, 1
  %v325 = vsel %vm320, %v322, %v324
  %v330 = vunpack.c.l.b16 %v313
  %v331 = vunpack.c.l.b16 %v314
  %v332 = vunpack.c.l.b16 %v315
  %v333 = vunpack.c.l.b16 %v316
  %v334 = vpack.c.b16 %v331, %v330
  %v335 = vpack.c.b16 %v333, %v332
  %v339 = vsel %vm191, %v323, 0
  %v342 = vsel %vm191, %v325, 0
  %344 = vmatprep.subr.bf16.mxu0 0
  %345 = vmatpush1.bf16.msra.mxu0 %v334
  %346 = vmatprep.subr.bf16.mxu0 0
  %347 = vmatpush1.bf16.msra.mxu0 %v335
  %348 = vmatprep.subr.bf16.mxu0 0
  %349 = vmatpush1.bf16.msra.mxu0 0
  %350 = vmatprep.subr.bf16.mxu0 0
  %351 = vmatpush1.bf16.msra.mxu0 0
  %352 = vmatprep.subr.bf16.mxu0 0
  %353 = vmatpush1.bf16.msra.mxu0 0
  %354 = vmatprep.subr.bf16.mxu0 0
  %355 = vmatpush1.bf16.msra.mxu0 0
  %356 = vmatprep.subr.bf16.mxu0 0
  %357 = vmatpush1.bf16.msra.mxu0 0
  %358 = vmatprep.subr.bf16.mxu0 0
  %359 = vmatpush1.bf16.msra.mxu0 0
  %360 = vmatprep.subr.bf16.mxu0 0
  %361 = vmatpush1.bf16.msra.mxu0 0
  %362 = vmatprep.subr.bf16.mxu0 0
  %363 = vmatpush1.bf16.msra.mxu0 0
  %364 = vmatprep.subr.bf16.mxu0 0
  %365 = vmatpush1.bf16.msra.mxu0 0
  %366 = vmatprep.subr.bf16.mxu0 0
  %367 = vmatpush1.bf16.msra.mxu0 0
  %368 = vmatprep.subr.bf16.mxu0 0
  %369 = vmatpush1.bf16.msra.mxu0 0
  %370 = vmatprep.subr.bf16.mxu0 0
  %371 = vmatpush1.bf16.msra.mxu0 0
  %372 = vmatprep.subr.bf16.mxu0 0
  %373 = vmatpush1.bf16.msra.mxu0 0
  %374 = vmatprep.subr.bf16.mxu0 0
  %375 = vmatpush1.bf16.msra.mxu0 0
  %376 = vmatprep.mubr.bf16.mxu0 0
  %377 = vmatmul.mubr.bf16.gmra.mrb[0].mxu0 %v339
  %v378 = vpop.f32.mrb[0].mxu0
  %v379 = vadd.f32 0.0, %v378
  %v380 = vpop.f32.mrb[0].mxu0
  %v381 = vpop.f32.mrb[0].mxu0
  %v382 = vadd.f32 0.0, %v381
  %v383 = vpop.f32.mrb[0].mxu0
  %384 = vmatprep.mubr.bf16.mxu0 0
  %385 = vmatmul.mubr.bf16.gmra.mrb[0].mxu0 %v342
  %v386 = vpop.f32.mrb[0].mxu0
  %v387 = vadd.f32 0.0, %v386
  %v388 = vpop.f32.mrb[0].mxu0
  %v389 = vpop.f32.mrb[0].mxu0
  %v390 = vadd.f32 0.0, %v389
  %v391 = vpop.f32.mrb[0].mxu0
  %392 = vdwg.mxu0
  %v393 = vadd.f32 %v298, %v379
  %v394 = vadd.f32 %v301, %v382
  %v395 = vadd.f32 %v306, %v387
  %v396 = vadd.f32 %v309, %v390
  %s397 = scalar_lea.vmem %s2, 48
  %v398 = vld [vmem:[%s397] sm:$0xf]
  %v399 = vld [vmem:[%s397 + $0x4] sm:$0xf]
  %v400 = vld [vmem:[%s397 + $0x8] sm:$0xf]
  %v401 = vld [vmem:[%s397 + $0xc] sm:$0xf]
  %vm402 = vsmask.f32 6400
  %v403 = vrot.slane %v160, 1
  %v404 = vrot.slane %v162, 2
  %v405 = vor.u32 %v403, %v404
  %v406 = vrot.slane %v171, 1
  %v407 = vrot.slane %v167, 2
  %v408 = vor.u32 %v406, %v407
  %v409 = vsel %vm402, %v405, %v408
  %v410 = vshrl.u32 0, 16
  %v412 = vrot.slane %v410, 1
  %v413 = vrot.slane %v175, 2
  %v414 = vor.u32 %v412, %v413
  %v415 = vsel %vm402, %v408, %v414
  %v420 = vunpack.c.l.b16 %v398
  %v421 = vunpack.c.l.b16 %v399
  %v422 = vunpack.c.l.b16 %v400
  %v423 = vunpack.c.l.b16 %v401
  %v424 = vpack.c.b16 %v421, %v420
  %v425 = vpack.c.b16 %v423, %v422
  %v429 = vsel %vm191, %v409, 0
  %v432 = vsel %vm191, %v415, 0
  %434 = vmatprep.subr.bf16.mxu0 0
  %435 = vmatpush1.bf16.msra.mxu0 %v424
  %436 = vmatprep.subr.bf16.mxu0 0
  %437 = vmatpush1.bf16.msra.mxu0 %v425
  %438 = vmatprep.subr.bf16.mxu0 0
  %439 = vmatpush1.bf16.msra.mxu0 0
  %440 = vmatprep.subr.bf16.mxu0 0
  %441 = vmatpush1.bf16.msra.mxu0 0
  %442 = vmatprep.subr.bf16.mxu0 0
  %443 = vmatpush1.bf16.msra.mxu0 0
  %444 = vmatprep.subr.bf16.mxu0 0
  %445 = vmatpush1.bf16.msra.mxu0 0
  %446 = vmatprep.subr.bf16.mxu0 0
  %447 = vmatpush1.bf16.msra.mxu0 0
  %448 = vmatprep.subr.bf16.mxu0 0
  %449 = vmatpush1.bf16.msra.mxu0 0
  %450 = vmatprep.subr.bf16.mxu0 0
  %451 = vmatpush1.bf16.msra.mxu0 0
  %452 = vmatprep.subr.bf16.mxu0 0
  %453 = vmatpush1.bf16.msra.mxu0 0
  %454 = vmatprep.subr.bf16.mxu0 0
  %455 = vmatpush1.bf16.msra.mxu0 0
  %456 = vmatprep.subr.bf16.mxu0 0
  %457 = vmatpush1.bf16.msra.mxu0 0
  %458 = vmatprep.subr.bf16.mxu0 0
  %459 = vmatpush1.bf16.msra.mxu0 0
  %460 = vmatprep.subr.bf16.mxu0 0
  %461 = vmatpush1.bf16.msra.mxu0 0
  %462 = vmatprep.subr.bf16.mxu0 0
  %463 = vmatpush1.bf16.msra.mxu0 0
  %464 = vmatprep.subr.bf16.mxu0 0
  %465 = vmatpush1.bf16.msra.mxu0 0
  %466 = vmatprep.mubr.bf16.mxu0 0
  %467 = vmatmul.mubr.bf16.gmra.mrb[0].mxu0 %v429
  %v468 = vpop.f32.mrb[0].mxu0
  %v469 = vadd.f32 0.0, %v468
  %v470 = vpop.f32.mrb[0].mxu0
  %v471 = vpop.f32.mrb[0].mxu0
  %v472 = vadd.f32 0.0, %v471
  %v473 = vpop.f32.mrb[0].mxu0
  %474 = vmatprep.mubr.bf16.mxu0 0
  %475 = vmatmul.mubr.bf16.gmra.mrb[0].mxu0 %v432
  %v476 = vpop.f32.mrb[0].mxu0
  %v477 = vadd.f32 0.0, %v476
  %v478 = vpop.f32.mrb[0].mxu0
  %v479 = vpop.f32.mrb[0].mxu0
  %v480 = vadd.f32 0.0, %v479
  %v481 = vpop.f32.mrb[0].mxu0
  %482 = vdwg.mxu0
  %v483 = vadd.f32 %v393, %v469
  %v484 = vadd.f32 %v394, %v472
  %v485 = vadd.f32 %v395, %v477
  %v486 = vadd.f32 %v396, %v480
  %s487 = scalar_lea.vmem %s2, 64
  %v488 = vld [vmem:[%s487] sm:$0xf]
  %v489 = vld [vmem:[%s487 + $0x4] sm:$0xf]
  %v490 = vld [vmem:[%s487 + $0x8] sm:$0xf]
  %v491 = vld [vmem:[%s487 + $0xc] sm:$0xf]
  %vm492 = vcmask 1045504
  %v493 = vrot.slane %v147, 2
  %v494 = vrot.slane %v148, 2
  %v495 = vsel %vm492, %v493, %v494
  %v496 = vrot.slane 0, 2
  %v497 = vsel %vm492, %v494, %v496
  %v502 = vunpack.c.l.b16 %v488
  %v503 = vunpack.c.l.b16 %v489
  %v504 = vunpack.c.l.b16 %v490
  %v505 = vunpack.c.l.b16 %v491
  %v506 = vpack.c.b16 %v503, %v502
  %v507 = vpack.c.b16 %v505, %v504
  %v511 = vsel %vm191, %v495, 0
  %v514 = vsel %vm191, %v497, 0
  %516 = vmatprep.subr.bf16.mxu0 0
  %517 = vmatpush1.bf16.msra.mxu0 %v506
  %518 = vmatprep.subr.bf16.mxu0 0
  %519 = vmatpush1.bf16.msra.mxu0 %v507
  %520 = vmatprep.subr.bf16.mxu0 0
  %521 = vmatpush1.bf16.msra.mxu0 0
  %522 = vmatprep.subr.bf16.mxu0 0
  %523 = vmatpush1.bf16.msra.mxu0 0
  %524 = vmatprep.subr.bf16.mxu0 0
  %525 = vmatpush1.bf16.msra.mxu0 0
  %526 = vmatprep.subr.bf16.mxu0 0
  %527 = vmatpush1.bf16.msra.mxu0 0
  %528 = vmatprep.subr.bf16.mxu0 0
  %529 = vmatpush1.bf16.msra.mxu0 0
  %530 = vmatprep.subr.bf16.mxu0 0
  %531 = vmatpush1.bf16.msra.mxu0 0
  %532 = vmatprep.subr.bf16.mxu0 0
  %533 = vmatpush1.bf16.msra.mxu0 0
  %534 = vmatprep.subr.bf16.mxu0 0
  %535 = vmatpush1.bf16.msra.mxu0 0
  %536 = vmatprep.subr.bf16.mxu0 0
  %537 = vmatpush1.bf16.msra.mxu0 0
  %538 = vmatprep.subr.bf16.mxu0 0
  %539 = vmatpush1.bf16.msra.mxu0 0
  %540 = vmatprep.subr.bf16.mxu0 0
  %541 = vmatpush1.bf16.msra.mxu0 0
  %542 = vmatprep.subr.bf16.mxu0 0
  %543 = vmatpush1.bf16.msra.mxu0 0
  %544 = vmatprep.subr.bf16.mxu0 0
  %545 = vmatpush1.bf16.msra.mxu0 0
  %546 = vmatprep.subr.bf16.mxu0 0
  %547 = vmatpush1.bf16.msra.mxu0 0
  %548 = vmatprep.mubr.bf16.mxu0 0
  %549 = vmatmul.mubr.bf16.gmra.mrb[0].mxu0 %v511
  %v550 = vpop.f32.mrb[0].mxu0
  %v551 = vadd.f32 0.0, %v550
  %v552 = vpop.f32.mrb[0].mxu0
  %v553 = vpop.f32.mrb[0].mxu0
  %v554 = vadd.f32 0.0, %v553
  %v555 = vpop.f32.mrb[0].mxu0
  %556 = vmatprep.mubr.bf16.mxu0 0
  %557 = vmatmul.mubr.bf16.gmra.mrb[0].mxu0 %v514
  %v558 = vpop.f32.mrb[0].mxu0
  %v559 = vadd.f32 0.0, %v558
  %v560 = vpop.f32.mrb[0].mxu0
  %v561 = vpop.f32.mrb[0].mxu0
  %v562 = vadd.f32 0.0, %v561
  %v563 = vpop.f32.mrb[0].mxu0
  %564 = vdwg.mxu0
  %v565 = vadd.f32 %v483, %v551
  %v566 = vadd.f32 %v484, %v554
  %v567 = vadd.f32 %v485, %v559
  %v568 = vadd.f32 %v486, %v562
  %v569 = vld [vmem:[%s3] sm:$0x1]
  %v571 = vlaneseq
  %v572 = vshrl.u32 %v571, 7
  %v573 = vsub.s32 0, %v572
  %v574 = vrot.slane %v569, %v573
  %v576 = vadd.f32 %v565, %v574
  %v577 = vadd.f32 %v566, %v574
  %v578 = vadd.f32 %v567, %v574
  %v579 = vadd.f32 %v568, %v574
  %v580 = vmax.f32 %v576, 0.0
  %v581 = vmax.f32 %v577, 0.0
  %v582 = vmax.f32 %v578, 0.0
  %v583 = vmax.f32 %v579, 0.0
  %v584 = vld [vmem:[%s4] sm:$0xff]
  %v585 = vld [vmem:[%s4 + $0x8] sm:$0xff]
  %v586 = vadd.f32 %v580, %v584
  %v587 = vadd.f32 %v581, %v585
  %v588 = vadd.f32 %v582, %v584
  %v589 = vadd.f32 %v583, %v585
  %vm590 = vcmask 195584
  %v591 = vsel %vm590, %v586, -inf
  %v592 = vsel %vm590, %v587, -inf
  %v593 = vmax.f32 %v591, %v592
  %v594 = vrot.slane %v593, 4
  %v595 = vmax.f32 %v593, %v594
  %v596 = vrot.slane %v595, 2
  %v597 = vmax.f32 %v595, %v596
  %v598 = vrot.slane %v597, 1
  %v599 = vmax.f32 %v597, %v598
  %v600 = vsel %vm590, %v588, -inf
  %v601 = vsel %vm590, %v589, -inf
  %v602 = vmax.f32 %v600, %v601
  %v603 = vrot.slane %v602, 4
  %v604 = vmax.f32 %v602, %v603
  %v605 = vrot.slane %v604, 2
  %v606 = vmax.f32 %v604, %v605
  %v607 = vrot.slane %v606, 1
  %v608 = vmax.f32 %v606, %v607
  %v609 = vpack.c.bf16 %v599, %v599
  %v610 = vpack.c.bf16 %v608, %v608
  %v611 = vld [vmem:[%s5] sm:$0xf]
  %v612 = vld [vmem:[%s5 + $0x4] sm:$0xf]
  %v613 = vld [vmem:[%s5 + $0x8] sm:$0xf]
  %v614 = vld [vmem:[%s6] sm:$0x1]
  %v616 = vlaneseq
  %v617 = vshrl.u32 %v616, 7
  %v618 = vsub.s32 0, %v617
  %v619 = vrot.slane %v614, %v618
  %v623 = vunpack.c.l.b16 %v609
  %v624 = vunpack.c.l.b16 %v610
  %vm625 = vcmask 1041409
  %v626 = vsel %vm625, %v624, %v623
  %v627 = vpack.c.b16 %v626, %v626
  %v631 = vunpack.c.l.b16 %v611
  %v632 = vunpack.c.l.b16 %v612
  %v633 = vunpack.c.l.b16 %v613
  %v634 = vpack.c.b16 %v632, %v631
  %v635 = vpack.c.b16 %v633, %v633
  %v638 = vsel %vm590, %v627, 0
  %vm640 = vcmask 1043456
  %v642 = vsel %vm640, %v635, 0
  %644 = vmatprep.subr.bf16.mxu0 0
  %645 = vmatpush1.bf16.msra.mxu0 %v634
  %646 = vmatprep.subr.bf16.mxu0 0
  %647 = vmatpush1.bf16.msra.mxu0 %v642
  %648 = vmatprep.subr.bf16.mxu0 0
  %649 = vmatpush1.bf16.msra.mxu0 0
  %650 = vmatprep.subr.bf16.mxu0 0
  %651 = vmatpush1.bf16.msra.mxu0 0
  %652 = vmatprep.subr.bf16.mxu0 0
  %653 = vmatpush1.bf16.msra.mxu0 0
  %654 = vmatprep.subr.bf16.mxu0 0
  %655 = vmatpush1.bf16.msra.mxu0 0
  %656 = vmatprep.subr.bf16.mxu0 0
  %657 = vmatpush1.bf16.msra.mxu0 0
  %658 = vmatprep.subr.bf16.mxu0 0
  %659 = vmatpush1.bf16.msra.mxu0 0
  %660 = vmatprep.subr.bf16.mxu0 0
  %661 = vmatpush1.bf16.msra.mxu0 0
  %662 = vmatprep.subr.bf16.mxu0 0
  %663 = vmatpush1.bf16.msra.mxu0 0
  %664 = vmatprep.subr.bf16.mxu0 0
  %665 = vmatpush1.bf16.msra.mxu0 0
  %666 = vmatprep.subr.bf16.mxu0 0
  %667 = vmatpush1.bf16.msra.mxu0 0
  %668 = vmatprep.subr.bf16.mxu0 0
  %669 = vmatpush1.bf16.msra.mxu0 0
  %670 = vmatprep.subr.bf16.mxu0 0
  %671 = vmatpush1.bf16.msra.mxu0 0
  %672 = vmatprep.subr.bf16.mxu0 0
  %673 = vmatpush1.bf16.msra.mxu0 0
  %674 = vmatprep.subr.bf16.mxu0 0
  %675 = vmatpush1.bf16.msra.mxu0 0
  %676 = vmatprep.mubr.bf16.mxu0 0
  %677 = vmatmul.mubr.bf16.gmra.mrb[0].mxu0 %v638
  %v678 = vpop.f32.mrb[0].mxu0
  %v679 = vadd.f32 %v619, %v678
  %v680 = vpop.f32.mrb[0].mxu0
  %v681 = vpop.f32.mrb[0].mxu0
  %v682 = vpop.f32.mrb[0].mxu0
  %683 = vdwg.mxu0
  %v684 = vpack.c.bf16 %v679, %v679
  %685 = vst [vmem:[%s7] sm:$0x1] %v684
  // Predicated region
  $region30: #{textcnn_forward.1} parent=0 // pred_check
    _
  $region31: #{textcnn_forward.1} parent=0 // pred_check_branch
    %687 = sbr.rel (0) target = $region33
  $region32: #{textcnn_forward.1} parent=0 // pred_region
    _
  $region33: #{textcnn_forward.1} parent=0 // pred_fallthru
    _
  // Predicated region
  $region34: #{textcnn_forward.1} parent=0 // pred_check
    _
  $region35: #{textcnn_forward.1} parent=0 // pred_check_branch
    %689 = sbr.rel (0) target = $region37
  $region36: #{textcnn_forward.1} parent=0 // pred_region
    _
  $region37: #{textcnn_forward.1} parent=0 // pred_fallthru
    _

</llo_original>
